<compile_context>
chip_gen: v7x
topology: tpu7x:2x2x1
jax: 0.10.0
libtpu: 0.0.40
codegen_flags: <defaults>
</compile_context>

<pallas_src>
import functools

import jax
import jax.numpy as jnp
from jax.experimental import pallas as pl
from jax.experimental.pallas import tpu as pltpu


def _layer_norm_kernel(x_ref, gamma_ref, *rest, eps, has_bias):
    if has_bias:
        beta_ref, o_ref = rest
    else:
        (o_ref,) = rest

    x = x_ref[...].astype(jnp.float32)              # (tile_rows, H)
    h = x.shape[-1]

    # One fused statistics pass over the tile: Σx and Σx² together.
    sum_x = jnp.sum(x, axis=-1, keepdims=True)      # (tile_rows, 1)
    sum_x2 = jnp.sum(x * x, axis=-1, keepdims=True)
    mean = sum_x * (1.0 / h)
    # Unbiased (ddof=1) variance, matching torch.std(); clamp the tiny
    # negative rounding residue of the Σx² − H·mean² form before sqrt.
    var = jnp.maximum(sum_x2 - h * (mean * mean), 0.0) * (1.0 / (h - 1))
    std = jnp.sqrt(var)
    # eps is added to std (not to the variance), matching the uer module.
    # approx=False keeps exact-division f32 parity with the reference
    # (approx=True would introduce ~1e-3 relative error).
    inv = pl.reciprocal(std + eps, approx=False)    # (tile_rows, 1)

    gamma = gamma_ref[...].astype(jnp.float32)      # (1, H)
    # out = (x*inv - mean*inv) * gamma (+ beta): per-row scale/shift, so no
    # full-tile (x - mean) temporary has to stay live across the reduction.
    shift = mean * inv                              # (tile_rows, 1)
    out = (x * inv - shift) * gamma
    if has_bias:
        out = out + beta_ref[...].astype(jnp.float32)
    o_ref[...] = out.astype(o_ref.dtype)


def _generation_budgets():
    """Return (tile_vmem_budget, vmem_limit_bytes) with physical headroom."""
    vmem_cap = None
    try:
        info = pltpu.get_tpu_info()
        vmem_cap = getattr(info, "vmem_capacity_bytes", None)
    except Exception:  # unknown runtime / interpret mode -> be conservative
        vmem_cap = None
    if vmem_cap is not None and vmem_cap > (64 << 20):
        # v5e / v6e: 128 MiB physical VMEM.
        return 32 << 20, 96 << 20
    # v7x (64 MiB per TensorCore) or unknown.
    return 16 << 20, 48 << 20


def _choose_tile_rows(n_rows, hidden, io_itemsize, *, tile_vmem_budget,
                      tile_bytes_target=8 << 20):
    """Pick a row-tile size (multiple of 8 sublanes)."""
    io_row = io_itemsize * hidden                   # block-buffer bytes / row
    f32_row = 4 * hidden                            # in-kernel f32 bytes / row
    # Live VMEM per tile-row: 2x in + 2x out block buffers (double-buffered
    # BlockSpec DMA) at the I/O dtype, plus ~2 full-tile f32 temporaries
    # (the x cast and the out intermediate) in compiler scratch.
    live_row = 4 * io_row + 2 * f32_row
    fit = max(8, tile_vmem_budget // live_row)
    # Byte-based cap on the input tile itself; beyond ~8 MiB the ~0.35 µs
    # per-grid-step pipeline overhead is already well amortized.
    cap = max(8, tile_bytes_target // io_row)
    tile = min(fit, cap, max(n_rows, 1))
    tile = max(8, (tile // 8) * 8)

    # Best-effort: keep the grid-step count even so v7x's two TensorCores
    # split the "parallel" grid axis evenly (no-op on 1-TC v5e/v6e).
    steps = -(-n_rows // tile)
    if steps > 1 and steps % 2 == 1:
        cand = -(-n_rows // (steps + 1))
        cand = max(8, ((cand + 7) // 8) * 8)
        if cand <= tile and (-(-n_rows // cand)) % 2 == 0:
            tile = cand
    return tile


def layer_norm(x, gamma, beta=None, *, eps=1e-6, tile_rows=None,
               vmem_limit_bytes=None):
    """LayerNorm matching uer/layers/layer_norm.py forward semantics.

    x: (..., hidden); gamma/beta: (hidden,).  Normalization over the last
    axis with unbiased std and eps added to std (not variance).
    """
    has_bias = beta is not None
    orig_shape = x.shape
    hidden = orig_shape[-1]
    if hidden < 2:
        # Unbiased std divides by (hidden - 1).
        raise ValueError("layer_norm requires hidden >= 2 (unbiased std).")
    x2d = x.reshape(-1, hidden)
    n_rows = x2d.shape[0]

    tile_budget, default_limit = _generation_budgets()
    if vmem_limit_bytes is None:
        vmem_limit_bytes = default_limit
    if tile_rows is None:
        tile_rows = _choose_tile_rows(
            n_rows, hidden, jnp.dtype(x.dtype).itemsize,
            tile_vmem_budget=tile_budget)

    inputs = [x2d, gamma.reshape(1, hidden)]
    in_specs = [
        pl.BlockSpec((tile_rows, hidden), lambda i: (i, 0)),
        pl.BlockSpec((1, hidden), lambda i: (0, 0)),
    ]
    if has_bias:
        # Only DMA beta when it actually exists (no dummy zeros buffer).
        inputs.append(beta.reshape(1, hidden))
        in_specs.append(pl.BlockSpec((1, hidden), lambda i: (0, 0)))

    kernel = functools.partial(_layer_norm_kernel, eps=eps, has_bias=has_bias)

    out = pl.pallas_call(
        kernel,
        out_shape=jax.ShapeDtypeStruct((n_rows, hidden), x.dtype),
        grid_spec=pltpu.PrefetchScalarGridSpec(
            num_scalar_prefetch=0,
            # cdiv grid: Pallas masks the ragged last row-block, so no padding
            # concatenate (and no extra HBM round trip) in the wrapper.
            grid=(pl.cdiv(n_rows, tile_rows),),
            in_specs=in_specs,
            out_specs=pl.BlockSpec((tile_rows, hidden), lambda i: (i, 0)),
        ),
        compiler_params=pltpu.CompilerParams(
            dimension_semantics=("parallel",),
            # Scoped VMEM default is only 16/32 MiB; raise it so the enlarged
            # row tiles stay double-buffered, with headroom under physical
            # VMEM (48 MiB on v7x's 64 MiB/TC, 96 MiB on v5e/v6e's 128 MiB).
            vmem_limit_bytes=vmem_limit_bytes,
        ),
    )(*inputs)

    return out.reshape(orig_shape)


def _ref_layer_norm(x, gamma, beta, eps):
    mean = jnp.mean(x, axis=-1, keepdims=True)
    std = jnp.sqrt(
        jnp.sum((x - mean) ** 2, axis=-1, keepdims=True) / (x.shape[-1] - 1))
    out = gamma * (x - mean) / (std + eps)
    if beta is not None:
        out = out + beta
    return out


if __name__ == "__main__":
    key = jax.random.PRNGKey(0)
    batch, seq, hidden = 2, 8, 32
    x = jax.random.normal(key, (batch, seq, hidden), dtype=jnp.float32)

    # Deterministic parameter init matching nn.Parameter(torch.ones/zeros).
    gamma = jnp.ones((hidden,), dtype=jnp.float32)
    beta = jnp.zeros((hidden,), dtype=jnp.float32)

    out = jax.block_until_ready(layer_norm(x, gamma, beta, eps=1e-6))
    ref = _ref_layer_norm(x, gamma, beta, 1e-6)
    assert jnp.allclose(out, ref, atol=1e-5, rtol=1e-5), "mismatch (bias path)"

    # Ragged row count (15 rows, not a multiple of 8) + has_bias=False path.
    x2 = jax.random.normal(jax.random.PRNGKey(1), (3, 5, hidden),
                           dtype=jnp.float32)
    out2 = jax.block_until_ready(layer_norm(x2, gamma, None, eps=1e-6))
    ref2 = _ref_layer_norm(x2, gamma, None, 1e-6)
    assert jnp.allclose(out2, ref2, atol=1e-5, rtol=1e-5), "mismatch (ragged)"

    print("KERNEL_OK")
</pallas_src>

<mosaic_0001>
module attributes {stable_mosaic.version = 11 : i64} {
  func.func @_layer_norm_kernel(%arg0: i32, %arg1: memref<16x32xf32, #tpu.memory_space<vmem>>, %arg2: memref<1x32xf32, #tpu.memory_space<vmem>>, %arg3: memref<1x32xf32, #tpu.memory_space<vmem>>, %arg4: memref<16x32xf32, #tpu.memory_space<vmem>>) attributes {dimension_semantics = [#tpu.dimension_semantics<parallel>], iteration_bounds = array<i64: 1>, scalar_prefetch = 0 : i64, scratch_operands = 0 : i64, tpu.core_type = #tpu.core_type<tc>, window_params = [{transform_indices = @transform_0, window_bounds = array<i64: 16, 32>}, {pipeline_mode = #tpu.pipeline_mode<synchronous>, transform_indices = @transform_1, window_bounds = array<i64: 1, 32>}, {pipeline_mode = #tpu.pipeline_mode<synchronous>, transform_indices = @transform_2, window_bounds = array<i64: 1, 32>}, {transform_indices = @transform_3, window_bounds = array<i64: 16, 32>}]} {
    %c0 = arith.constant 0 : index
    %c0_0 = arith.constant 0 : index
    %0 = vector.load %arg1[%c0, %c0_0] : memref<16x32xf32, #tpu.memory_space<vmem>>, vector<16x32xf32>
    %cst = arith.constant dense<0.000000e+00> : vector<16xf32>
    %1 = vector.multi_reduction <add>, %0, %cst [1] : vector<16x32xf32> to vector<16xf32>
    %2 = vector.shape_cast %1 : vector<16xf32> to vector<16x1xf32>
    %3 = arith.mulf %0, %0 : vector<16x32xf32>
    %cst_1 = arith.constant dense<0.000000e+00> : vector<16xf32>
    %4 = vector.multi_reduction <add>, %3, %cst_1 [1] : vector<16x32xf32> to vector<16xf32>
    %5 = vector.shape_cast %4 : vector<16xf32> to vector<16x1xf32>
    %cst_2 = arith.constant 3.125000e-02 : f32
    %6 = vector.broadcast %cst_2 : f32 to vector<16x1xf32>
    %7 = arith.mulf %2, %6 : vector<16x1xf32>
    %8 = arith.mulf %7, %7 : vector<16x1xf32>
    %cst_3 = arith.constant 3.200000e+01 : f32
    %9 = vector.broadcast %cst_3 : f32 to vector<16x1xf32>
    %10 = arith.mulf %9, %8 : vector<16x1xf32>
    %11 = arith.subf %5, %10 : vector<16x1xf32>
    %cst_4 = arith.constant 0.000000e+00 : f32
    %12 = vector.broadcast %cst_4 : f32 to vector<16x1xf32>
    %13 = arith.maximumf %11, %12 : vector<16x1xf32>
    %cst_5 = arith.constant 0.0322580636 : f32
    %14 = vector.broadcast %cst_5 : f32 to vector<16x1xf32>
    %15 = arith.mulf %13, %14 : vector<16x1xf32>
    %16 = math.sqrt %15 : vector<16x1xf32>
    %cst_6 = arith.constant 9.99999997E-7 : f32
    %17 = vector.broadcast %cst_6 : f32 to vector<16x1xf32>
    %18 = arith.addf %16, %17 : vector<16x1xf32>
    %19 = tpu.reciprocal %18 : vector<16x1xf32> -> vector<16x1xf32>
    %c0_7 = arith.constant 0 : index
    %c0_8 = arith.constant 0 : index
    %20 = vector.load %arg2[%c0_7, %c0_8] : memref<1x32xf32, #tpu.memory_space<vmem>>, vector<1x32xf32>
    %21 = arith.mulf %7, %19 : vector<16x1xf32>
    %22 = vector.broadcast %19 : vector<16x1xf32> to vector<16x32xf32>
    %23 = arith.mulf %0, %22 : vector<16x32xf32>
    %24 = vector.broadcast %21 : vector<16x1xf32> to vector<16x32xf32>
    %25 = arith.subf %23, %24 : vector<16x32xf32>
    %26 = vector.broadcast %20 : vector<1x32xf32> to vector<16x32xf32>
    %27 = arith.mulf %25, %26 : vector<16x32xf32>
    %c0_9 = arith.constant 0 : index
    %c0_10 = arith.constant 0 : index
    %28 = vector.load %arg3[%c0_9, %c0_10] : memref<1x32xf32, #tpu.memory_space<vmem>>, vector<1x32xf32>
    %29 = vector.broadcast %28 : vector<1x32xf32> to vector<16x32xf32>
    %30 = arith.addf %27, %29 : vector<16x32xf32>
    %c0_11 = arith.constant 0 : index
    %c0_12 = arith.constant 0 : index
    %31 = vector.load %arg4[%c0_11, %c0_12] : memref<16x32xf32, #tpu.memory_space<vmem>>, vector<16x32xf32>
    tpu.vector_store %arg4[%c0_11, %c0_12], %30 {strides = array<i32>} : memref<16x32xf32, #tpu.memory_space<vmem>>, vector<16x32xf32>,
    return
  }
  func.func @transform_0(%arg0: i32) -> (i32, i32) {
    %c0_i32 = arith.constant 0 : i32
    %c0_i32_0 = arith.constant 0 : i32
    return %arg0, %c0_i32 : i32, i32
  }
  func.func @transform_1(%arg0: i32) -> (i32, i32) {
    %c0_i32 = arith.constant 0 : i32
    %c0_i32_0 = arith.constant 0 : i32
    %c0_i32_1 = arith.constant 0 : i32
    return %c0_i32, %c0_i32_0 : i32, i32
  }
  func.func @transform_2(%arg0: i32) -> (i32, i32) {
    %c0_i32 = arith.constant 0 : i32
    %c0_i32_0 = arith.constant 0 : i32
    %c0_i32_1 = arith.constant 0 : i32
    return %c0_i32, %c0_i32_0 : i32, i32
  }
  func.func @transform_3(%arg0: i32) -> (i32, i32) {
    %c0_i32 = arith.constant 0 : i32
    %c0_i32_0 = arith.constant 0 : i32
    return %arg0, %c0_i32 : i32, i32
  }
}

</mosaic_0001>

<llo_original>
// kernel: tpu_custom_call.1
$region0: #{tpu_custom_call.1}
  #allocation0 [shape = 'u32[]', space=smem, size = 0x4, offset = 0x4, fixed_abs, tag = 'smem constant byte address 0x4 - core index']
  #allocation1 [shape = 'u32[144,128]{1,0:T(1,128)}', space=vmem, size = 0x12000, scoped, tag = 'internal scratch']
  %s0 = inlined_call_operand.hbm [shape: f32[16,32], index: 0, kind: input, shape index: {}]
  %s1 = inlined_call_operand.vmem [shape: f32[1,32], index: 1, kind: input, shape index: {}]
  %s2 = inlined_call_operand.vmem [shape: f32[1,32], index: 2, kind: input, shape index: {}]
  %s3 = inlined_call_operand.hbm [shape: f32[16,32], index: 3, kind: output, shape index: {}]
  %s4 = sld [smem:[#allocation0]]
  $region26: #{tpu_custom_call.1} parent=0
    _
  %s6 = ssub.s32 1, %s4
  %s7 = scalar_select 0, %s6, %s4
  $region1: #{tpu_custom_call.1} parent=0
    #allocation2 [shape = 'u8[8192]{0}', space=vmem, size = 0x2000, scoped, tag = 'input window, operand 0, single buffered']
    #allocation3 [shape = 's32[1]{0}', space=sflag, size = 0x4, scoped, tag = 'scoped memory for tpu_custom_call.1']
    #allocation4 [shape = 's32[1]{0}', space=sflag, size = 0x4, scoped, tag = 'scoped memory for tpu_custom_call.1']
    #allocation5 [shape = 'u8[8192]{0}', space=vmem, size = 0x2000, scoped, tag = 'output window, operand 0, single buffered']
    %8 = vsyncpa [#allocation3], 0
    %9 = vsyncpa [#allocation4], 0
    // Predicated region
    $region2: #{tpu_custom_call.1} parent=1 // pred_check
      _
    $region3: #{tpu_custom_call.1} parent=1 // pred_check_branch
      %11 = sbr.rel (0) target = $region5
    $region4: #{tpu_custom_call.1} parent=1 // pred_region
      %s13 = ssub.s32 256, 256
      %14 = vsyncadd [#allocation3], %s13
      %s15 = sshll.u32 [#allocation2], 4
      %s16 = int_to_ptr.vmem [resolvable:$true] %s15
      %21 = dma.hbm_to_vmem [thread:$0]  %s0, 256, %s16, [#allocation3], 128, 128, 8
    $region5: #{tpu_custom_call.1} parent=1 // pred_fallthru
      _
    // Predicated region
    $region6: #{tpu_custom_call.1} parent=1 // pred_check
      _
    $region7: #{tpu_custom_call.1} parent=1 // pred_check_branch
      %23 = sbr.rel (0) target = $region9
    $region8: #{tpu_custom_call.1} parent=1 // pred_region
      _
    $region9: #{tpu_custom_call.1} parent=1 // pred_fallthru
      _
    // Predicated region
    $region10: #{tpu_custom_call.1} parent=1 // pred_check
      _
    $region11: #{tpu_custom_call.1} parent=1 // pred_check_branch
      %25 = sbr.rel (0) target = $region13
    $region12: #{tpu_custom_call.1} parent=1 // pred_region
      _
    $region13: #{tpu_custom_call.1} parent=1 // pred_fallthru
      _
    // Predicated region
    $region14: #{tpu_custom_call.1} parent=1 // pred_check
      _
    $region15: #{tpu_custom_call.1} parent=1 // pred_check_branch
      %27 = sbr.rel (0) target = $region17
    $region16: #{tpu_custom_call.1} parent=1 // pred_region
      %28 = dma.done [#allocation3], 256
    $region17: #{tpu_custom_call.1} parent=1 // pred_fallthru
      _
    %v29 = vld [vmem:[#allocation2] sm:$0xff]
    %v30 = vld [vmem:[#allocation2 + $0x8] sm:$0xff]
    %vm31 = vcmask 261120
    %v32 = vsel %vm31, %v29, 0.0
    %33 = vadd.xlane.f32.xlu0 %v32
    %v34 = vpop.xlane.xlu0 %33
    %v35 = vsel %vm31, %v30, 0.0
    %36 = vadd.xlane.f32.xlu0 %v35
    %v37 = vpop.xlane.xlu0 %36
    %v38 = vmul.f32 %v29, %v29
    %v39 = vmul.f32 %v30, %v30
    %v40 = vsel %vm31, %v38, 0.0
    %41 = vadd.xlane.f32.xlu0 %v40
    %v42 = vpop.xlane.xlu0 %41
    %v43 = vsel %vm31, %v39, 0.0
    %44 = vadd.xlane.f32.xlu0 %v43
    %v45 = vpop.xlane.xlu0 %44
    %v46 = vmul.f32 %v34, 0.03125
    %v47 = vmul.f32 %v37, 0.03125
    %v48 = vmul.f32 %v46, %v46
    %v49 = vmul.f32 %v47, %v47
    %v50 = vmul.f32 %v48, 32.0
    %v51 = vmul.f32 %v49, 32.0
    %v52 = vsub.f32 %v42, %v50
    %v53 = vsub.f32 %v45, %v51
    %v54 = vmax.f32 %v52, 0.0
    %v55 = vmax.f32 %v53, 0.0
    %v56 = vmul.f32 %v54, 0.032258064
    %v57 = vmul.f32 %v55, 0.032258064
    %v58 = vrsqrt.pop %v56
    %v59 = vmul.f32 %v56, %v58
    %vm60 = vcmp.eq.f32.partialorder %v56, inf
    %v61 = vsel %vm60, %v56, %v59
    %vm62 = vcmp.eq.f32.partialorder %v56, 0.0
    %v63 = vand.u32 %v56, 2147483648
    %v64 = vsel %vm62, %v63, %v61
    %v65 = vrsqrt.pop %v57
    %v66 = vmul.f32 %v57, %v65
    %vm67 = vcmp.eq.f32.partialorder %v57, inf
    %v68 = vsel %vm67, %v57, %v66
    %vm69 = vcmp.eq.f32.partialorder %v57, 0.0
    %v70 = vand.u32 %v57, 2147483648
    %v71 = vsel %vm69, %v70, %v68
    %v72 = vadd.f32 %v64, 1e-06
    %v73 = vadd.f32 %v71, 1e-06
    %v74 = vrcp.pop %v72
    %v75 = vrcp.pop %v73
    %v76 = vld [vmem:[%s1] sm:$0x1]
    %v77 = vmul.f32 %v46, %v74
    %v78 = vmul.f32 %v47, %v75
    %v79 = vmul.f32 %v29, %v74
    %v80 = vmul.f32 %v30, %v75
    %v81 = vsub.f32 %v79, %v77
    %v82 = vsub.f32 %v80, %v78
    %v84 = vlaneseq
    %v85 = vshrl.u32 %v84, 7
    %v86 = vsub.s32 0, %v85
    %v87 = vrot.slane %v76, %v86
    %v89 = vmul.f32 %v81, %v87
    %v90 = vmul.f32 %v82, %v87
    %v91 = vld [vmem:[%s2] sm:$0x1]
    %v93 = vlaneseq
    %v94 = vshrl.u32 %v93, 7
    %v95 = vsub.s32 0, %v94
    %v96 = vrot.slane %v91, %v95
    %v98 = vadd.f32 %v89, %v96
    %v99 = vadd.f32 %v90, %v96
    %100 = vst.msk [vmem:[#allocation5] sm:$0xff] %vm31, %v98
    %101 = vst.msk [vmem:[#allocation5 + $0x8] sm:$0xff] %vm31, %v99
    // Predicated region
    $region18: #{tpu_custom_call.1} parent=1 // pred_check
      _
    $region19: #{tpu_custom_call.1} parent=1 // pred_check_branch
      %103 = sbr.rel (0) target = $region21
    $region20: #{tpu_custom_call.1} parent=1 // pred_region
      %s105 = ssub.s32 256, 256
      %106 = vsyncadd [#allocation4], %s105
      %s107 = sshll.u32 [#allocation5], 4
      %s108 = int_to_ptr.vmem [resolvable:$true] %s107
      %113 = dma.vmem_to_hbm [thread:$0]  %s108, 256, %s3, [#allocation4], 128, 128, 8
    $region21: #{tpu_custom_call.1} parent=1 // pred_fallthru
      _
    // Predicated region
    $region22: #{tpu_custom_call.1} parent=1 // pred_check
      _
    $region23: #{tpu_custom_call.1} parent=1 // pred_check_branch
      %115 = sbr.rel (0) target = $region25
    $region24: #{tpu_custom_call.1} parent=1 // pred_region
      %116 = dma.done [#allocation4], 256
    $region25: #{tpu_custom_call.1} parent=1 // pred_fallthru
      _
    %117 = vsyncpa [#allocation3], 1
    %118 = vsyncpa [#allocation4], 1

</llo_original>
